<compile_context>
chip_gen: v7x
topology: tpu7x:2x2x1
jax: 0.10.0
libtpu: 0.0.40
codegen_flags: <defaults>
</compile_context>

<pallas_src>
import functools

import jax
import jax.numpy as jnp
from jax.experimental import pallas as pl
from jax.experimental.pallas import tpu as pltpu


def _round_up(x, m):
    return -(-x // m) * m


def _mi_flat_kernel(eps, p1_ref, p2_ref, e1_ref, e2_ref, p12_ref, out_ref):
    """Lane-dense path: joint is (tb, n*n); outer product rebuilt via 0/1 matmuls."""
    p12 = p12_ref[...].astype(jnp.float32)                       # (tb, n*n)
    p1 = p1_ref[...].astype(jnp.float32)                         # (tb, n)
    p2 = p2_ref[...].astype(jnp.float32)                         # (tb, n)
    # Exact one-hot expansion on the MXU:
    #   p1v[t, i*n + j] = p1[t, i]   ;   p2v[t, i*n + j] = p2[t, j]
    p1v = jnp.dot(p1, e1_ref[...], preferred_element_type=jnp.float32)
    p2v = jnp.dot(p2, e2_ref[...], preferred_element_type=jnp.float32)
    prod = p1v * p2v + eps                                       # (tb, n*n)
    mi = jnp.sum(p12 * jnp.log(p12 / prod + eps), axis=1, keepdims=True)   # (tb, 1)
    h = -jnp.sum(p12 * jnp.log(p12 + eps), axis=1, keepdims=True)          # (tb, 1)
    out_ref[...] = 1.0 - mi / h


def _mi_3d_kernel(eps, p1_ref, p2_ref, p12_ref, out_ref):
    """Fallback for n >= 128 (already lane-dense): marginals pre-shaped in wrapper."""
    p12 = p12_ref[...].astype(jnp.float32)                       # (tb, n, n)
    prod = (p1_ref[...].astype(jnp.float32) *                    # (tb, n, 1)
            p2_ref[...].astype(jnp.float32)) + eps               # (tb, 1, n) -> (tb, n, n)
    mi = jnp.sum(jnp.sum(p12 * jnp.log(p12 / prod + eps), axis=2),
                 axis=1, keepdims=True)                          # (tb, 1)
    h = -jnp.sum(jnp.sum(p12 * jnp.log(p12 + eps), axis=2),
                 axis=1, keepdims=True)
    out_ref[...] = 1.0 - mi / h


def _step_vmem_bytes(tb, n, itemsize, flat):
    """Rough VMEM for one pipelined grid step: double-buffered inputs plus ~4 live
    f32 temporaries the size of the joint block (padded to (8,128) tiling)."""
    if flat:
        in_slab = _round_up(n * n, 128) * itemsize
        f32_slab = _round_up(n * n, 128) * 4
        marg = 2 * _round_up(n, 128) * itemsize                  # p1 + p2 rows
        fixed = 2 * 2 * _round_up(n, 8) * _round_up(n * n, 128) * 4   # E1, E2 (2 bufs each)
    else:
        in_slab = _round_up(n, 8) * _round_up(n, 128) * itemsize
        f32_slab = _round_up(n, 8) * _round_up(n, 128) * 4
        marg = (_round_up(n, 8) * 128 + 8 * _round_up(n, 128)) * itemsize
        fixed = 0
    return 2 * tb * (in_slab + marg) + 4 * tb * f32_slab + fixed


def _pick_batch_tile(batch, n, itemsize, vmem_cap, flat):
    """Largest legal batch tile that fits ~45% of VMEM, keeps the f32 joint block
    <= ~8 MiB, and (when possible) leaves >= 4 grid steps for megacore pipelining."""
    budget = int(vmem_cap * 0.45)
    f32_slab = (_round_up(n * n, 128) if flat
                else _round_up(n, 8) * _round_up(n, 128)) * 4
    divs = [d for d in range(1, batch + 1)
            if batch % d == 0 and (d % 8 == 0 or d == batch)]
    fitting = [d for d in divs
               if _step_vmem_bytes(d, n, itemsize, flat) <= budget] or [min(divs)]
    sized = [d for d in fitting if d * f32_slab <= 8 * 1024 * 1024] or [min(fitting)]
    multi = [d for d in sized if batch // d >= 4] or sized
    return max(multi)


def mutual_information_loss(p1, p2, p12, *, tb=None):
    """Pallas TPU implementation of MutualInformationLoss.forward.

    p1, p2: (batch, n) marginals; p12: (batch, n, n) joint.  Returns (batch,) f32.
    (Like the reference, the result is NaN if h == 0 for a degenerate one-hot joint.)
    """
    batch, n = p1.shape
    assert p2.shape == (batch, n)
    assert p12.shape == (batch, n, n)
    eps = float(jnp.finfo(p1.dtype).eps)          # matches torch.finfo(p1.dtype).eps

    try:
        vmem_cap = int(pltpu.get_tpu_info().vmem_capacity_bytes)
    except Exception:
        vmem_cap = 64 * 1024 * 1024               # conservative: v7x per-TensorCore VMEM

    flat = n < 128                                # lane-dense rewrite only pays for small n
    itemsize = jnp.dtype(p12.dtype).itemsize      # joint stays in native dtype in HBM
    if tb is None:
        tb = _pick_batch_tile(batch, n, itemsize, vmem_cap, flat)
    assert batch % tb == 0 and (tb % 8 == 0 or tb == batch)
    grid = (batch // tb,)

    step_vmem = _step_vmem_bytes(tb, n, itemsize, flat)
    vmem_limit = int(min(vmem_cap - (4 << 20), max(32 << 20, step_vmem + (8 << 20))))
    vmem_limit = max(vmem_limit, 16 << 20)

    if flat:
        p12_flat = p12.reshape(batch, n * n)      # free XLA reshape, no dtype copy
        k = jnp.arange(n * n)
        rows = jnp.arange(n)[:, None]
        e1 = (rows == (k[None, :] // n)).astype(jnp.float32)    # (n, n*n): picks p1[k//n]
        e2 = (rows == (k[None, :] % n)).astype(jnp.float32)     # (n, n*n): picks p2[k%n]
        kernel = functools.partial(_mi_flat_kernel, eps)
        in_specs = [
            pl.BlockSpec((tb, n), lambda i: (i, 0)),            # p1 tile
            pl.BlockSpec((tb, n), lambda i: (i, 0)),            # p2 tile
            pl.BlockSpec((n, n * n), lambda i: (0, 0)),         # E1 (resident)
            pl.BlockSpec((n, n * n), lambda i: (0, 0)),         # E2 (resident)
            pl.BlockSpec((tb, n * n), lambda i: (i, 0)),        # p12 (dominant stream)
        ]
        args = (p1, p2, e1, e2, p12_flat)
    else:
        # Marginals pre-shaped by XLA (tiny arrays) so the kernel needs no transpose.
        p1_c = p1[:, :, None]                     # (batch, n, 1)
        p2_r = p2[:, None, :]                     # (batch, 1, n)
        kernel = functools.partial(_mi_3d_kernel, eps)
        in_specs = [
            pl.BlockSpec((tb, n, 1), lambda i: (i, 0, 0)),
            pl.BlockSpec((tb, 1, n), lambda i: (i, 0, 0)),
            pl.BlockSpec((tb, n, n), lambda i: (i, 0, 0)),
        ]
        args = (p1_c, p2_r, p12)
        # TODO(synk): for very large n (8*n*n*4 bytes per minimal tile approaching
        # VMEM), add a second "arbitrary" grid axis over the joint's rows with
        # scratch accumulators and a pl.when finalize.

    out = pl.pallas_call(
        kernel,
        out_shape=jax.ShapeDtypeStruct((batch, 1), jnp.float32),
        grid_spec=pltpu.PrefetchScalarGridSpec(
            num_scalar_prefetch=0,
            grid=grid,
            in_specs=in_specs,
            out_specs=pl.BlockSpec((tb, 1), lambda i: (i, 0)),
        ),
        compiler_params=pltpu.CompilerParams(
            dimension_semantics=("parallel",),
            vmem_limit_bytes=vmem_limit,
        ),
    )(*args)
    return out[:, 0]


def _reference(p1, p2, p12):
    # Pure-JAX reference mirroring the PyTorch forward.
    eps = jnp.finfo(p1.dtype).eps
    product_p = p1[:, :, None] * p2[:, None, :] + eps
    mi = jnp.sum(p12 * jnp.log(p12 / product_p + eps), axis=(1, 2))
    h = -jnp.sum(p12 * jnp.log(p12 + eps), axis=(1, 2))
    return 1.0 - mi / h


if __name__ == "__main__":
    key = jax.random.PRNGKey(0)
    batch, n = 64, 16

    # Deterministic example: a random joint distribution per batch row plus its
    # exact marginals (softmax over the flattened n*n bins).
    logits = jax.random.normal(key, (batch, n * n), jnp.float32)
    p12 = jax.nn.softmax(logits, axis=-1).reshape(batch, n, n)
    p1 = jnp.sum(p12, axis=2)
    p2 = jnp.sum(p12, axis=1)

    out = jax.block_until_ready(mutual_information_loss(p1, p2, p12))
    ref = _reference(p1, p2, p12)
    assert out.shape == (batch,)
    assert bool(jnp.allclose(out, ref, atol=1e-4, rtol=1e-4)), (out, ref)
    print("KERNEL_OK")
</pallas_src>

<mosaic_0001>
module attributes {stable_mosaic.version = 11 : i64} {
  func.func @_mi_flat_kernel(%arg0: i32, %arg1: memref<16x16xf32, #tpu.memory_space<vmem>>, %arg2: memref<16x16xf32, #tpu.memory_space<vmem>>, %arg3: memref<16x256xf32, #tpu.memory_space<vmem>>, %arg4: memref<16x256xf32, #tpu.memory_space<vmem>>, %arg5: memref<16x256xf32, #tpu.memory_space<vmem>>, %arg6: memref<16x1xf32, #tpu.memory_space<vmem>>) attributes {dimension_semantics = [#tpu.dimension_semantics<parallel>], iteration_bounds = array<i64: 4>, scalar_prefetch = 0 : i64, scratch_operands = 0 : i64, tpu.core_type = #tpu.core_type<tc>, window_params = [{transform_indices = @transform_0, window_bounds = array<i64: 16, 16>}, {transform_indices = @transform_1, window_bounds = array<i64: 16, 16>}, {pipeline_mode = #tpu.pipeline_mode<synchronous>, transform_indices = @transform_2, window_bounds = array<i64: 16, 256>}, {pipeline_mode = #tpu.pipeline_mode<synchronous>, transform_indices = @transform_3, window_bounds = array<i64: 16, 256>}, {transform_indices = @transform_4, window_bounds = array<i64: 16, 256>}, {transform_indices = @transform_5, window_bounds = array<i64: 16, 1>}]} {
    %c0 = arith.constant 0 : index
    %c0_0 = arith.constant 0 : index
    %0 = vector.load %arg5[%c0, %c0_0] : memref<16x256xf32, #tpu.memory_space<vmem>>, vector<16x256xf32>
    %c0_1 = arith.constant 0 : index
    %c0_2 = arith.constant 0 : index
    %1 = vector.load %arg1[%c0_1, %c0_2] : memref<16x16xf32, #tpu.memory_space<vmem>>, vector<16x16xf32>
    %c0_3 = arith.constant 0 : index
    %c0_4 = arith.constant 0 : index
    %2 = vector.load %arg2[%c0_3, %c0_4] : memref<16x16xf32, #tpu.memory_space<vmem>>, vector<16x16xf32>
    %c0_5 = arith.constant 0 : index
    %c0_6 = arith.constant 0 : index
    %3 = vector.load %arg3[%c0_5, %c0_6] : memref<16x256xf32, #tpu.memory_space<vmem>>, vector<16x256xf32>
    %cst = arith.constant dense<0.000000e+00> : vector<16x256xf32>
    %4 = tpu.matmul %1, %3, %cst {dimension_numbers = #tpu.dot_dimension_numbers<[1], [0], [0], [1], [0, 0, 1, 1], [], []>} : vector<16x16xf32>, vector<16x256xf32>, vector<16x256xf32> -> vector<16x256xf32>
    %c0_7 = arith.constant 0 : index
    %c0_8 = arith.constant 0 : index
    %5 = vector.load %arg4[%c0_7, %c0_8] : memref<16x256xf32, #tpu.memory_space<vmem>>, vector<16x256xf32>
    %cst_9 = arith.constant dense<0.000000e+00> : vector<16x256xf32>
    %6 = tpu.matmul %2, %5, %cst_9 {dimension_numbers = #tpu.dot_dimension_numbers<[1], [0], [0], [1], [0, 0, 1, 1], [], []>} : vector<16x16xf32>, vector<16x256xf32>, vector<16x256xf32> -> vector<16x256xf32>
    %7 = arith.mulf %4, %6 : vector<16x256xf32>
    %cst_10 = arith.constant 1.1920929E-7 : f32
    %8 = vector.broadcast %cst_10 : f32 to vector<16x256xf32>
    %9 = arith.addf %7, %8 : vector<16x256xf32>
    %10 = arith.divf %0, %9 : vector<16x256xf32>
    %cst_11 = arith.constant 1.1920929E-7 : f32
    %11 = vector.broadcast %cst_11 : f32 to vector<16x256xf32>
    %12 = arith.addf %10, %11 : vector<16x256xf32>
    %13 = math.log %12 : vector<16x256xf32>
    %14 = arith.mulf %0, %13 : vector<16x256xf32>
    %cst_12 = arith.constant dense<0.000000e+00> : vector<16xf32>
    %15 = vector.multi_reduction <add>, %14, %cst_12 [1] : vector<16x256xf32> to vector<16xf32>
    %16 = vector.shape_cast %15 : vector<16xf32> to vector<16x1xf32>
    %cst_13 = arith.constant 1.1920929E-7 : f32
    %17 = vector.broadcast %cst_13 : f32 to vector<16x256xf32>
    %18 = arith.addf %0, %17 : vector<16x256xf32>
    %19 = math.log %18 : vector<16x256xf32>
    %20 = arith.mulf %0, %19 : vector<16x256xf32>
    %cst_14 = arith.constant dense<0.000000e+00> : vector<16xf32>
    %21 = vector.multi_reduction <add>, %20, %cst_14 [1] : vector<16x256xf32> to vector<16xf32>
    %22 = vector.shape_cast %21 : vector<16xf32> to vector<16x1xf32>
    %cst_15 = arith.constant 0.000000e+00 : f32
    %23 = vector.broadcast %cst_15 : f32 to vector<16x1xf32>
    %24 = arith.subf %23, %22 : vector<16x1xf32>
    %25 = arith.divf %16, %24 : vector<16x1xf32>
    %cst_16 = arith.constant 1.000000e+00 : f32
    %26 = vector.broadcast %cst_16 : f32 to vector<16x1xf32>
    %27 = arith.subf %26, %25 : vector<16x1xf32>
    %c0_17 = arith.constant 0 : index
    %c0_18 = arith.constant 0 : index
    %28 = vector.load %arg6[%c0_17, %c0_18] : memref<16x1xf32, #tpu.memory_space<vmem>>, vector<16x1xf32>
    tpu.vector_store %arg6[%c0_17, %c0_18], %27 {strides = array<i32>} : memref<16x1xf32, #tpu.memory_space<vmem>>, vector<16x1xf32>,
    return
  }
  func.func @transform_0(%arg0: i32) -> (i32, i32) {
    %c0_i32 = arith.constant 0 : i32
    %c0_i32_0 = arith.constant 0 : i32
    return %arg0, %c0_i32 : i32, i32
  }
  func.func @transform_1(%arg0: i32) -> (i32, i32) {
    %c0_i32 = arith.constant 0 : i32
    %c0_i32_0 = arith.constant 0 : i32
    return %arg0, %c0_i32 : i32, i32
  }
  func.func @transform_2(%arg0: i32) -> (i32, i32) {
    %c0_i32 = arith.constant 0 : i32
    %c0_i32_0 = arith.constant 0 : i32
    %c0_i32_1 = arith.constant 0 : i32
    return %c0_i32, %c0_i32_0 : i32, i32
  }
  func.func @transform_3(%arg0: i32) -> (i32, i32) {
    %c0_i32 = arith.constant 0 : i32
    %c0_i32_0 = arith.constant 0 : i32
    %c0_i32_1 = arith.constant 0 : i32
    return %c0_i32, %c0_i32_0 : i32, i32
  }
  func.func @transform_4(%arg0: i32) -> (i32, i32) {
    %c0_i32 = arith.constant 0 : i32
    %c0_i32_0 = arith.constant 0 : i32
    return %arg0, %c0_i32 : i32, i32
  }
  func.func @transform_5(%arg0: i32) -> (i32, i32) {
    %c0_i32 = arith.constant 0 : i32
    %c0_i32_0 = arith.constant 0 : i32
    return %arg0, %c0_i32 : i32, i32
  }
}

</mosaic_0001>

<llo_original>
// kernel: tpu_custom_call.1
$region0: #{tpu_custom_call.1}
  #allocation0 [shape = 'u32[]', space=smem, size = 0x4, offset = 0x4, fixed_abs, tag = 'smem constant byte address 0x4 - core index']
  #allocation1 [shape = 'u32[144,128]{1,0:T(1,128)}', space=vmem, size = 0x12000, scoped, tag = 'internal scratch']
  %s0 = inlined_call_operand.vmem [shape: f32[64,16], index: 0, kind: input, shape index: {}]
  %s1 = inlined_call_operand.vmem [shape: f32[64,16], index: 1, kind: input, shape index: {}]
  %s2 = inlined_call_operand.vmem [shape: f32[16,256], index: 2, kind: input, shape index: {}]
  %s3 = inlined_call_operand.hbm [shape: f32[16,256], index: 3, kind: input, shape index: {}]
  %s4 = inlined_call_operand.vmem [shape: f32[64,256], index: 4, kind: input, shape index: {}]
  %s5 = inlined_call_operand.vmem [shape: f32[64,1], index: 5, kind: output, shape index: {}]
  %s6 = sld [smem:[#allocation0]]
  $region57: #{tpu_custom_call.1} parent=0
    _
  %s8 = ssub.s32 1, %s6
  %s9 = scalar_select 0, %s8, %s6
  $region1: #{tpu_custom_call.1} parent=0
    #allocation2 [shape = 'u8[16384]{0}', space=vmem, size = 0x4000, scoped, tag = 'input window, operand 3, single buffered']
    #allocation3 [shape = 's32[2]{0}', space=sflag, size = 0x8, scoped, tag = 'scoped memory for tpu_custom_call.1']
    %10 = vsyncpa [#allocation3], 0
    loop: start=0, step=1, limit=6
    $region2: #{tpu_custom_call.1} parent=1 // loop_pre_header
      _
    $region3: #{tpu_custom_call.1} parent=1 // loop_header
      %s12 = sphi 0, %s16
      %p13 = scmp.ge.s32.totalorder %s12, 6
      %s22 = sphi 0, %s24
      %s25 = sphi 0, %s22
      %s26 = sphi 0, %s25
      %s42 = sphi 0, %s26
      %s48 = sphi 0, %s50
      %s51 = sphi 0, %s48
      %s52 = sphi 0, %s51
      %s68 = sphi 0, %s52
      %s72 = sphi 0, %s72
      %s74 = sphi 0, %s72
      %s75 = sphi 0, %s74
      %s89 = sphi 0, %s75
      %s93 = sphi 0, %s93
      %s95 = sphi 0, %s93
      %s96 = sphi 0, %s95
      %s110 = sphi 0, %s96
      %s116 = sphi 0, %s118
      %s119 = sphi 0, %s116
      %s120 = sphi 0, %s119
      %s136 = sphi 0, %s120
      %s142 = sphi 0, %s144
      %s145 = sphi 0, %s142
      %s146 = sphi 0, %s145
      %s162 = sphi 0, %s146
    $region4: #{tpu_custom_call.1} parent=1 // loop_header_branch
      %15 = sbr.rel (%p13) target = $region8
    $region5: #{tpu_custom_call.1} parent=1 // loop_body
      %s17 = ssub.s32 %s12, 1
      %s18 = ssub.s32 %s12, 2
      %s19 = sadd.s32 %s12, 1
      %s20 = ssub.s32 %s12, %s19
      %p21 = scmp.eq.s32.totalorder %s20, 0
      %s23 = sadd.s32 %s22, 1
      %s24 = scalar_select %p21, %s22, %s23
      %p27 = pneg %p21
      %p28 = scmp.eq.s32.totalorder %s12, 3
      %p29 = por %p27, %p28
      %p30 = scmp.ne.s32.totalorder %s22, %s25
      %p31 = scmp.eq.s32.totalorder %s12, 0
      %p32 = por %p30, %p31
      %p33 = scmp.ne.s32.totalorder %s22, %s25
      %p34 = scmp.eq.s32.totalorder %s17, 3
      %p35 = por %p33, %p34
      %p36 = scmp.ne.s32.totalorder %s25, %s26
      %p37 = scmp.eq.s32.totalorder %s17, 0
      %p38 = por %p36, %p37
      %p39 = scmp.ne.s32.totalorder %s25, %s26
      %p40 = scmp.eq.s32.totalorder %s18, 3
      %p41 = por %p39, %p40
      %p43 = scmp.ne.s32.totalorder %s26, %s42
      %p44 = scmp.eq.s32.totalorder %s18, 0
      %p45 = por %p43, %p44
      %s46 = ssub.s32 %s12, %s19
      %p47 = scmp.eq.s32.totalorder %s46, 0
      %s49 = sadd.s32 %s48, 1
      %s50 = scalar_select %p47, %s48, %s49
      %p53 = pneg %p47
      %p54 = scmp.eq.s32.totalorder %s12, 3
      %p55 = por %p53, %p54
      %p56 = scmp.ne.s32.totalorder %s48, %s51
      %p57 = scmp.eq.s32.totalorder %s12, 0
      %p58 = por %p56, %p57
      %p59 = scmp.ne.s32.totalorder %s48, %s51
      %p60 = scmp.eq.s32.totalorder %s17, 3
      %p61 = por %p59, %p60
      %p62 = scmp.ne.s32.totalorder %s51, %s52
      %p63 = scmp.eq.s32.totalorder %s17, 0
      %p64 = por %p62, %p63
      %p65 = scmp.ne.s32.totalorder %s51, %s52
      %p66 = scmp.eq.s32.totalorder %s18, 3
      %p67 = por %p65, %p66
      %p69 = scmp.ne.s32.totalorder %s52, %s68
      %p70 = scmp.eq.s32.totalorder %s18, 0
      %p71 = por %p69, %p70
      %s73 = sadd.s32 %s72, 1
      %p76 = scmp.eq.s32.totalorder %s12, 3
      %p77 = scmp.ne.s32.totalorder %s72, %s74
      %p78 = scmp.eq.s32.totalorder %s12, 0
      %p79 = por %p77, %p78
      %p80 = scmp.ne.s32.totalorder %s72, %s74
      %p81 = scmp.eq.s32.totalorder %s17, 3
      %p82 = por %p80, %p81
      %p83 = scmp.ne.s32.totalorder %s74, %s75
      %p84 = scmp.eq.s32.totalorder %s17, 0
      %p85 = por %p83, %p84
      %p86 = scmp.ne.s32.totalorder %s74, %s75
      %p87 = scmp.eq.s32.totalorder %s18, 3
      %p88 = por %p86, %p87
      %p90 = scmp.ne.s32.totalorder %s75, %s89
      %p91 = scmp.eq.s32.totalorder %s18, 0
      %p92 = por %p90, %p91
      %s94 = sadd.s32 %s93, 1
      %p97 = scmp.eq.s32.totalorder %s12, 3
      %p98 = scmp.ne.s32.totalorder %s93, %s95
      %p99 = scmp.eq.s32.totalorder %s12, 0
      %p100 = por %p98, %p99
      %p101 = scmp.ne.s32.totalorder %s93, %s95
      %p102 = scmp.eq.s32.totalorder %s17, 3
      %p103 = por %p101, %p102
      %p104 = scmp.ne.s32.totalorder %s95, %s96
      %p105 = scmp.eq.s32.totalorder %s17, 0
      %p106 = por %p104, %p105
      %p107 = scmp.ne.s32.totalorder %s95, %s96
      %p108 = scmp.eq.s32.totalorder %s18, 3
      %p109 = por %p107, %p108
      %p111 = scmp.ne.s32.totalorder %s96, %s110
      %p112 = scmp.eq.s32.totalorder %s18, 0
      %p113 = por %p111, %p112
      %s114 = ssub.s32 %s12, %s19
      %p115 = scmp.eq.s32.totalorder %s114, 0
      %s117 = sadd.s32 %s116, 1
      %s118 = scalar_select %p115, %s116, %s117
      %p121 = pneg %p115
      %p122 = scmp.eq.s32.totalorder %s12, 3
      %p123 = por %p121, %p122
      %p124 = scmp.ne.s32.totalorder %s116, %s119
      %p125 = scmp.eq.s32.totalorder %s12, 0
      %p126 = por %p124, %p125
      %p127 = scmp.ne.s32.totalorder %s116, %s119
      %p128 = scmp.eq.s32.totalorder %s17, 3
      %p129 = por %p127, %p128
      %p130 = scmp.ne.s32.totalorder %s119, %s120
      %p131 = scmp.eq.s32.totalorder %s17, 0
      %p132 = por %p130, %p131
      %p133 = scmp.ne.s32.totalorder %s119, %s120
      %p134 = scmp.eq.s32.totalorder %s18, 3
      %p135 = por %p133, %p134
      %p137 = scmp.ne.s32.totalorder %s120, %s136
      %p138 = scmp.eq.s32.totalorder %s18, 0
      %p139 = por %p137, %p138
      %s140 = ssub.s32 %s12, %s19
      %p141 = scmp.eq.s32.totalorder %s140, 0
      %s143 = sadd.s32 %s142, 1
      %s144 = scalar_select %p141, %s142, %s143
      %p147 = pneg %p141
      %p148 = scmp.eq.s32.totalorder %s12, 3
      %p149 = por %p147, %p148
      %p150 = scmp.ne.s32.totalorder %s142, %s145
      %p151 = scmp.eq.s32.totalorder %s12, 0
      %p152 = por %p150, %p151
      %p153 = scmp.ne.s32.totalorder %s142, %s145
      %p154 = scmp.eq.s32.totalorder %s17, 3
      %p155 = por %p153, %p154
      %p156 = scmp.ne.s32.totalorder %s145, %s146
      %p157 = scmp.eq.s32.totalorder %s17, 0
      %p158 = por %p156, %p157
      %p159 = scmp.ne.s32.totalorder %s145, %s146
      %p160 = scmp.eq.s32.totalorder %s18, 3
      %p161 = por %p159, %p160
      %p163 = scmp.ne.s32.totalorder %s146, %s162
      %p164 = scmp.eq.s32.totalorder %s18, 0
      %p165 = por %p163, %p164
      %p166 = scmp.le.s32.totalorder 1, %s12
      %p167 = scmp.lt.s32.totalorder %s12, 5
      %p168 = pnand %p166, %p167
      %p169 = pneg %p168
      // Predicated region
      $region9: #{tpu_custom_call.1} parent=5 // pred_check
        _
      $region10: #{tpu_custom_call.1} parent=5 // pred_check_branch
        %171 = sbr.rel (%p168) target = $region12
      $region11: #{tpu_custom_call.1} parent=5 // pred_region
        %s172 = ssub.s32 %s12, 1
        // Predicated region
        $region13: #{tpu_custom_call.1} parent=11 // pred_check
          %p173 = pneg %p85
        $region14: #{tpu_custom_call.1} parent=11 // pred_check_branch
          %175 = sbr.rel (%p173) target = $region16
        $region15: #{tpu_custom_call.1} parent=11 // pred_region
          _
        $region16: #{tpu_custom_call.1} parent=11 // pred_fallthru
          _
        // Predicated region
        $region17: #{tpu_custom_call.1} parent=11 // pred_check
          %p176 = pneg %p106
        $region18: #{tpu_custom_call.1} parent=11 // pred_check_branch
          %178 = sbr.rel (%p176) target = $region20
        $region19: #{tpu_custom_call.1} parent=11 // pred_region
          %s180 = ssub.s32 512, 512
          %181 = vsyncadd [#allocation3], %s180
          %s182 = sshll.u32 [#allocation2], 4
          %s183 = int_to_ptr.vmem [resolvable:$true] %s182
          %188 = dma.hbm_to_vmem [thread:$0]  %s3, 512, %s183, [#allocation3], 256, 256, 16
        $region20: #{tpu_custom_call.1} parent=11 // pred_fallthru
          _
      $region12: #{tpu_custom_call.1} parent=5 // pred_fallthru
        _
      %p189 = scmp.lt.s32.totalorder %s12, 4
      // Predicated region
      $region21: #{tpu_custom_call.1} parent=5 // pred_check
        %p190 = pneg %p189
      $region22: #{tpu_custom_call.1} parent=5 // pred_check_branch
        %192 = sbr.rel (%p190) target = $region24
      $region23: #{tpu_custom_call.1} parent=5 // pred_region
        // Predicated region
        $region25: #{tpu_custom_call.1} parent=23 // pred_check
          %p193 = pneg %p32
        $region26: #{tpu_custom_call.1} parent=23 // pred_check_branch
          %195 = sbr.rel (%p193) target = $region28
        $region27: #{tpu_custom_call.1} parent=23 // pred_region
          %s196 = smul.u32 2, %s12
          %p197 = scmp.lt.s32.totalorder %s196, 7
          %s198 = scalar_select %p197, %s196, 7
          %s199 = smul.addr %s198, 8
          %s200 = scalar_lea.vmem %s0, %s199
          %s201 = smul.u32 2, %s12
        $region28: #{tpu_custom_call.1} parent=23 // pred_fallthru
          _
        // Predicated region
        $region29: #{tpu_custom_call.1} parent=23 // pred_check
          %p202 = pneg %p58
        $region30: #{tpu_custom_call.1} parent=23 // pred_check_branch
          %204 = sbr.rel (%p202) target = $region32
        $region31: #{tpu_custom_call.1} parent=23 // pred_region
          %s205 = smul.u32 2, %s12
          %p206 = scmp.lt.s32.totalorder %s205, 7
          %s207 = scalar_select %p206, %s205, 7
          %s208 = smul.addr %s207, 8
          %s209 = scalar_lea.vmem %s1, %s208
          %s210 = smul.u32 2, %s12
        $region32: #{tpu_custom_call.1} parent=23 // pred_fallthru
          _
        // Predicated region
        $region33: #{tpu_custom_call.1} parent=23 // pred_check
          %p211 = pneg %p126
        $region34: #{tpu_custom_call.1} parent=23 // pred_check_branch
          %213 = sbr.rel (%p211) target = $region36
        $region35: #{tpu_custom_call.1} parent=23 // pred_region
          %s214 = smul.u32 2, %s12
          %p215 = scmp.lt.s32.totalorder %s214, 7
          %s216 = scalar_select %p215, %s214, 7
          %s217 = smul.addr %s216, 2
          %s218 = smul.addr %s217, 8
          %s219 = scalar_lea.vmem %s4, %s218
          %s220 = smul.u32 2, %s12
        $region36: #{tpu_custom_call.1} parent=23 // pred_fallthru
          _
      $region24: #{tpu_custom_call.1} parent=5 // pred_fallthru
        _
      %p221 = scmp.le.s32.totalorder 1, %s12
      %p222 = scmp.lt.s32.totalorder %s12, 5
      %p223 = pnand %p221, %p222
      %p224 = pneg %p223
      // Predicated region
      $region37: #{tpu_custom_call.1} parent=5 // pred_check
        _
      $region38: #{tpu_custom_call.1} parent=5 // pred_check_branch
        %226 = sbr.rel (%p223) target = $region40
      $region39: #{tpu_custom_call.1} parent=5 // pred_region
        %s227 = ssub.s32 %s12, 1
        // Predicated region
        $region41: #{tpu_custom_call.1} parent=39 // pred_check
          %p228 = pneg %p106
        $region42: #{tpu_custom_call.1} parent=39 // pred_check_branch
          %230 = sbr.rel (%p228) target = $region44
        $region43: #{tpu_custom_call.1} parent=39 // pred_region
          %231 = dma.done [#allocation3], 512
        $region44: #{tpu_custom_call.1} parent=39 // pred_fallthru
          _
        %s232 = smul.u32 2, %s17
        %p233 = scmp.lt.s32.totalorder %s232, 7
        %s234 = scalar_select %p233, %s232, 7
        %s235 = smul.addr %s234, 8
        %s236 = scalar_lea.vmem %s0, %s235
        %p237 = pneg %p38
        %p238 = pneg %p35
        %s239 = smul.u32 2, %s17
        %p240 = scmp.lt.s32.totalorder %s239, 7
        %s241 = scalar_select %p240, %s239, 7
        %s242 = smul.addr %s241, 8
        %s243 = scalar_lea.vmem %s1, %s242
        %p244 = pneg %p64
        %p245 = pneg %p61
        %p246 = pneg %p85
        %p247 = pneg %p82
        %p248 = pneg %p106
        %p249 = pneg %p103
        %s250 = smul.u32 2, %s17
        %p251 = scmp.lt.s32.totalorder %s250, 7
        %s252 = scalar_select %p251, %s250, 7
        %s253 = smul.addr %s252, 2
        %s254 = smul.addr %s253, 8
        %s255 = scalar_lea.vmem %s4, %s254
        %p256 = pneg %p132
        %p257 = pneg %p129
        %p258 = pneg %p158
        %p259 = pneg %p155
        %s260 = smul.u32 2, %s17
        %p261 = scmp.lt.s32.totalorder %s260, 7
        %s262 = scalar_select %p261, %s260, 7
        %s263 = smul.addr %s262, 8
        %s264 = scalar_lea.vmem %s5, %s263
        %s265 = smul.u32 2, %s17
        %p266 = scmp.lt.s32.totalorder %s265, 7
        %s267 = scalar_select %p266, %s265, 7
        %s268 = smul.addr %s267, 8
        %s269 = scalar_lea.vmem %s0, %s268
        %s270 = smul.u32 2, %s17
        %s271 = smul.u32 2, %s17
        %p272 = scmp.lt.s32.totalorder %s271, 7
        %s273 = scalar_select %p272, %s271, 7
        %s274 = smul.addr %s273, 8
        %s275 = scalar_lea.vmem %s1, %s274
        %s276 = smul.u32 2, %s17
        %s277 = smul.u32 2, %s17
        %p278 = scmp.lt.s32.totalorder %s277, 7
        %s279 = scalar_select %p278, %s277, 7
        %s280 = smul.addr %s279, 2
        %s281 = smul.addr %s280, 8
        %s282 = scalar_lea.vmem %s4, %s281
        %s283 = smul.u32 2, %s17
        %s284 = smul.u32 2, %s17
        %p285 = scmp.lt.s32.totalorder %s284, 7
        %s286 = scalar_select %p285, %s284, 7
        %s287 = smul.addr %s286, 8
        %s288 = scalar_lea.vmem %s5, %s287
        %s289 = smul.u32 2, %s17
        %v290 = vld [vmem:[%s282] sm:$0xff]
        %v291 = vld [vmem:[%s282 + $0x8] sm:$0xff]
        %v292 = vld [vmem:[%s282 + $0x10] sm:$0xff]
        %v293 = vld [vmem:[%s282 + $0x18] sm:$0xff]
        %v294 = vld [vmem:[%s269] sm:$0xff]
        %v295 = vld [vmem:[%s269 + $0x8] sm:$0xff]
        %v296 = vld [vmem:[%s275] sm:$0xff]
        %v297 = vld [vmem:[%s275 + $0x8] sm:$0xff]
        %v298 = vld [vmem:[%s2] sm:$0xff]
        %v299 = vld [vmem:[%s2 + $0x8] sm:$0xff]
        %v300 = vld [vmem:[%s2 + $0x10] sm:$0xff]
        %v301 = vld [vmem:[%s2 + $0x18] sm:$0xff]
        %vm302 = vcmask 130048
        %v304 = vsel %vm302, %v294, 0
        %v307 = vsel %vm302, %v295, 0
        %309 = vmatprep.subr.mxu0 %v299
        %310 = vmatpush1.msra.mxu0 %v298
        %311 = vmatprep.subr.mxu0 %v301
        %312 = vmatpush1.msra.mxu0 %v300
        %313 = vmatprep.subr.mxu0 0.0
        %314 = vmatpush1.msra.mxu0 0.0
        %315 = vmatprep.subr.mxu0 0.0
        %316 = vmatpush1.msra.mxu0 0.0
        %317 = vmatprep.subr.mxu0 0.0
        %318 = vmatpush1.msra.mxu0 0.0
        %319 = vmatprep.subr.mxu0 0.0
        %320 = vmatpush1.msra.mxu0 0.0
        %321 = vmatprep.subr.mxu0 0.0
        %322 = vmatpush1.msra.mxu0 0.0
        %323 = vmatprep.subr.mxu0 0.0
        %324 = vmatpush1.msra.mxu0 0.0
        %325 = vmatprep.subr.mxu0 0.0
        %326 = vmatpush1.msra.mxu0 0.0
        %327 = vmatprep.subr.mxu0 0.0
        %328 = vmatpush1.msra.mxu0 0.0
        %329 = vmatprep.subr.mxu0 0.0
        %330 = vmatpush1.msra.mxu0 0.0
        %331 = vmatprep.subr.mxu0 0.0
        %332 = vmatpush1.msra.mxu0 0.0
        %333 = vmatprep.subr.mxu0 0.0
        %334 = vmatpush1.msra.mxu0 0.0
        %335 = vmatprep.subr.mxu0 0.0
        %336 = vmatpush1.msra.mxu0 0.0
        %337 = vmatprep.subr.mxu0 0.0
        %338 = vmatpush1.msra.mxu0 0.0
        %339 = vmatprep.subr.mxu0 0.0
        %340 = vmatpush1.msra.mxu0 0.0
        %341 = vmatprep.subr.mxu0 0.0
        %342 = vmatpush1.msra.mxu0 0.0
        %343 = vmatprep.subr.mxu0 0.0
        %344 = vmatpush1.msra.mxu0 0.0
        %345 = vmatprep.subr.mxu0 0.0
        %346 = vmatpush1.msra.mxu0 0.0
        %347 = vmatprep.subr.mxu0 0.0
        %348 = vmatpush1.msra.mxu0 0.0
        %349 = vmatprep.subr.mxu0 0.0
        %350 = vmatpush1.msra.mxu0 0.0
        %351 = vmatprep.subr.mxu0 0.0
        %352 = vmatpush1.msra.mxu0 0.0
        %353 = vmatprep.subr.mxu0 0.0
        %354 = vmatpush1.msra.mxu0 0.0
        %355 = vmatprep.subr.mxu0 0.0
        %356 = vmatpush1.msra.mxu0 0.0
        %357 = vmatprep.subr.mxu0 0.0
        %358 = vmatpush1.msra.mxu0 0.0
        %359 = vmatprep.subr.mxu0 0.0
        %360 = vmatpush1.msra.mxu0 0.0
        %361 = vmatprep.subr.mxu0 0.0
        %362 = vmatpush1.msra.mxu0 0.0
        %363 = vmatprep.subr.mxu0 0.0
        %364 = vmatpush1.msra.mxu0 0.0
        %365 = vmatprep.subr.mxu0 0.0
        %366 = vmatpush1.msra.mxu0 0.0
        %367 = vmatprep.subr.mxu0 0.0
        %368 = vmatpush1.msra.mxu0 0.0
        %369 = vmatprep.subr.mxu0 0.0
        %370 = vmatpush1.msra.mxu0 0.0
        %371 = vmatprep.subr.mxu0 0.0
        %372 = vmatpush1.msra.mxu0 0.0
        %373 = vmatprep.mubr.f32.mxu0 0.0
        %374 = vmatmul.mubr.f32.gmra.mrb[0].mxu0 %v304
        %v375 = vpop.f32.mrb[0].mxu0
        %v376 = vadd.f32 0.0, %v375
        %v377 = vpop.f32.mrb[0].mxu0
        %v378 = vadd.f32 0.0, %v377
        %379 = vmatprep.mubr.f32.mxu0 0.0
        %380 = vmatmul.mubr.f32.gmra.mrb[0].mxu0 %v307
        %v381 = vpop.f32.mrb[0].mxu0
        %v382 = vadd.f32 0.0, %v381
        %v383 = vpop.f32.mrb[0].mxu0
        %v384 = vadd.f32 0.0, %v383
        %385 = vdwg.mxu0
        %v386 = vld [vmem:[#allocation2] sm:$0xff]
        %v387 = vld [vmem:[#allocation2 + $0x8] sm:$0xff]
        %v388 = vld [vmem:[#allocation2 + $0x10] sm:$0xff]
        %v389 = vld [vmem:[#allocation2 + $0x18] sm:$0xff]
        %v391 = vsel %vm302, %v296, 0
        %v394 = vsel %vm302, %v297, 0
        %396 = vmatprep.subr.mxu0 %v387
        %397 = vmatpush1.msra.mxu0 %v386
        %398 = vmatprep.subr.mxu0 %v389
        %399 = vmatpush1.msra.mxu0 %v388
        %400 = vmatprep.subr.mxu0 0.0
        %401 = vmatpush1.msra.mxu0 0.0
        %402 = vmatprep.subr.mxu0 0.0
        %403 = vmatpush1.msra.mxu0 0.0
        %404 = vmatprep.subr.mxu0 0.0
        %405 = vmatpush1.msra.mxu0 0.0
        %406 = vmatprep.subr.mxu0 0.0
        %407 = vmatpush1.msra.mxu0 0.0
        %408 = vmatprep.subr.mxu0 0.0
        %409 = vmatpush1.msra.mxu0 0.0
        %410 = vmatprep.subr.mxu0 0.0
        %411 = vmatpush1.msra.mxu0 0.0
        %412 = vmatprep.subr.mxu0 0.0
        %413 = vmatpush1.msra.mxu0 0.0
        %414 = vmatprep.subr.mxu0 0.0
        %415 = vmatpush1.msra.mxu0 0.0
        %416 = vmatprep.subr.mxu0 0.0
        %417 = vmatpush1.msra.mxu0 0.0
        %418 = vmatprep.subr.mxu0 0.0
        %419 = vmatpush1.msra.mxu0 0.0
        %420 = vmatprep.subr.mxu0 0.0
        %421 = vmatpush1.msra.mxu0 0.0
        %422 = vmatprep.subr.mxu0 0.0
        %423 = vmatpush1.msra.mxu0 0.0
        %424 = vmatprep.subr.mxu0 0.0
        %425 = vmatpush1.msra.mxu0 0.0
        %426 = vmatprep.subr.mxu0 0.0
        %427 = vmatpush1.msra.mxu0 0.0
        %428 = vmatprep.subr.mxu0 0.0
        %429 = vmatpush1.msra.mxu0 0.0
        %430 = vmatprep.subr.mxu0 0.0
        %431 = vmatpush1.msra.mxu0 0.0
        %432 = vmatprep.subr.mxu0 0.0
        %433 = vmatpush1.msra.mxu0 0.0
        %434 = vmatprep.subr.mxu0 0.0
        %435 = vmatpush1.msra.mxu0 0.0
        %436 = vmatprep.subr.mxu0 0.0
        %437 = vmatpush1.msra.mxu0 0.0
        %438 = vmatprep.subr.mxu0 0.0
        %439 = vmatpush1.msra.mxu0 0.0
        %440 = vmatprep.subr.mxu0 0.0
        %441 = vmatpush1.msra.mxu0 0.0
        %442 = vmatprep.subr.mxu0 0.0
        %443 = vmatpush1.msra.mxu0 0.0
        %444 = vmatprep.subr.mxu0 0.0
        %445 = vmatpush1.msra.mxu0 0.0
        %446 = vmatprep.subr.mxu0 0.0
        %447 = vmatpush1.msra.mxu0 0.0
        %448 = vmatprep.subr.mxu0 0.0
        %449 = vmatpush1.msra.mxu0 0.0
        %450 = vmatprep.subr.mxu0 0.0
        %451 = vmatpush1.msra.mxu0 0.0
        %452 = vmatprep.subr.mxu0 0.0
        %453 = vmatpush1.msra.mxu0 0.0
        %454 = vmatprep.subr.mxu0 0.0
        %455 = vmatpush1.msra.mxu0 0.0
        %456 = vmatprep.subr.mxu0 0.0
        %457 = vmatpush1.msra.mxu0 0.0
        %458 = vmatprep.subr.mxu0 0.0
        %459 = vmatpush1.msra.mxu0 0.0
        %460 = vmatprep.mubr.f32.mxu0 0.0
        %461 = vmatmul.mubr.f32.gmra.mrb[0].mxu0 %v391
        %v462 = vpop.f32.mrb[0].mxu0
        %v463 = vadd.f32 0.0, %v462
        %v464 = vpop.f32.mrb[0].mxu0
        %v465 = vadd.f32 0.0, %v464
        %466 = vmatprep.mubr.f32.mxu0 0.0
        %467 = vmatmul.mubr.f32.gmra.mrb[0].mxu0 %v394
        %v468 = vpop.f32.mrb[0].mxu0
        %v469 = vadd.f32 0.0, %v468
        %v470 = vpop.f32.mrb[0].mxu0
        %v471 = vadd.f32 0.0, %v470
        %472 = vdwg.mxu0
        %v473 = vmul.f32 %v376, %v463
        %v474 = vmul.f32 %v378, %v465
        %v475 = vmul.f32 %v382, %v469
        %v476 = vmul.f32 %v384, %v471
        %v477 = vadd.f32 %v473, 1.1920929e-07
        %v478 = vadd.f32 %v474, 1.1920929e-07
        %v479 = vadd.f32 %v475, 1.1920929e-07
        %v480 = vadd.f32 %v476, 1.1920929e-07
        %v481 = vrcp.pop %v477
        %v482 = vmul.f32 %v290, %v481
        %v483 = vrcp.pop %v478
        %v484 = vmul.f32 %v291, %v483
        %v485 = vrcp.pop %v479
        %v486 = vmul.f32 %v292, %v485
        %v487 = vrcp.pop %v480
        %v488 = vmul.f32 %v293, %v487
        %v489 = vadd.f32 %v482, 1.1920929e-07
        %v490 = vadd.f32 %v484, 1.1920929e-07
        %v491 = vadd.f32 %v486, 1.1920929e-07
        %v492 = vadd.f32 %v488, 1.1920929e-07
        %v493 = vlog2.pop %v489
        %v494 = vmul.f32 %v493, 0.6931472
        %v495 = vlog2.pop %v490
        %v496 = vmul.f32 %v495, 0.6931472
        %v497 = vlog2.pop %v491
        %v498 = vmul.f32 %v497, 0.6931472
        %v499 = vlog2.pop %v492
        %v500 = vmul.f32 %v499, 0.6931472
        %v501 = vmul.f32 %v290, %v494
        %v502 = vmul.f32 %v291, %v496
        %v503 = vmul.f32 %v292, %v498
        %v504 = vmul.f32 %v293, %v500
        %v505 = vadd.f32 %v501, %v502
        %506 = vadd.xlane.f32.xlu0 %v505
        %v507 = vpop.xlane.xlu0 %506
        %v508 = vadd.f32 %v503, %v504
        %509 = vadd.xlane.f32.xlu0 %v508
        %v510 = vpop.xlane.xlu0 %509
        %v511 = vadd.f32 %v290, 1.1920929e-07
        %v512 = vadd.f32 %v291, 1.1920929e-07
        %v513 = vadd.f32 %v292, 1.1920929e-07
        %v514 = vadd.f32 %v293, 1.1920929e-07
        %v515 = vlog2.pop %v511
        %v516 = vmul.f32 %v515, 0.6931472
        %v517 = vlog2.pop %v512
        %v518 = vmul.f32 %v517, 0.6931472
        %v519 = vlog2.pop %v513
        %v520 = vmul.f32 %v519, 0.6931472
        %v521 = vlog2.pop %v514
        %v522 = vmul.f32 %v521, 0.6931472
        %v523 = vmul.f32 %v290, %v516
        %v524 = vmul.f32 %v291, %v518
        %v525 = vmul.f32 %v292, %v520
        %v526 = vmul.f32 %v293, %v522
        %v527 = vadd.f32 %v523, %v524
        %528 = vadd.xlane.f32.xlu0 %v527
        %v529 = vpop.xlane.xlu0 %528
        %v530 = vadd.f32 %v525, %v526
        %531 = vadd.xlane.f32.xlu0 %v530
        %v532 = vpop.xlane.xlu0 %531
        %v533 = vsub.f32 0.0, %v529
        %v534 = vsub.f32 0.0, %v532
        %v535 = vrcp.pop %v533
        %v536 = vmul.f32 %v507, %v535
        %v537 = vrcp.pop %v534
        %v538 = vmul.f32 %v510, %v537
        %v539 = vsub.f32 1.0, %v536
        %v540 = vsub.f32 1.0, %v538
        %vm541 = vcmask 7168
        %542 = vst.msk [vmem:[%s288] sm:$0xff] %vm541, %v539
        %543 = vst.msk [vmem:[%s288 + $0x8] sm:$0xff] %vm541, %v540
        %s544 = smul.u32 2, %s17
        %p545 = scmp.lt.s32.totalorder %s544, 7
        %s546 = scalar_select %p545, %s544, 7
        %s547 = smul.addr %s546, 8
        %s548 = scalar_lea.vmem %s5, %s547
        // Predicated region
        $region45: #{tpu_custom_call.1} parent=39 // pred_check
          %p549 = pneg %p155
        $region46: #{tpu_custom_call.1} parent=39 // pred_check_branch
          %551 = sbr.rel (%p549) target = $region48
        $region47: #{tpu_custom_call.1} parent=39 // pred_region
          %s552 = smul.u32 2, %s17
        $region48: #{tpu_custom_call.1} parent=39 // pred_fallthru
          _
      $region40: #{tpu_custom_call.1} parent=5 // pred_fallthru
        _
      %p553 = scmp.le.s32.totalorder 2, %s12
      // Predicated region
      $region49: #{tpu_custom_call.1} parent=5 // pred_check
        %p554 = pneg %p553
      $region50: #{tpu_custom_call.1} parent=5 // pred_check_branch
        %556 = sbr.rel (%p554) target = $region52
      $region51: #{tpu_custom_call.1} parent=5 // pred_region
        %s557 = ssub.s32 %s12, 2
        // Predicated region
        $region53: #{tpu_custom_call.1} parent=51 // pred_check
          %p558 = pneg %p161
        $region54: #{tpu_custom_call.1} parent=51 // pred_check_branch
          %560 = sbr.rel (%p558) target = $region56
        $region55: #{tpu_custom_call.1} parent=51 // pred_region
          %s561 = smul.u32 2, %s18
          %p562 = scmp.lt.s32.totalorder %s561, 7
          %s563 = scalar_select %p562, %s561, 7
          %s564 = smul.addr %s563, 8
          %s565 = scalar_lea.vmem %s5, %s564
        $region56: #{tpu_custom_call.1} parent=51 // pred_fallthru
          _
      $region52: #{tpu_custom_call.1} parent=5 // pred_fallthru
        _
    $region6: #{tpu_custom_call.1} parent=1 // loop_footer
      %s16 = sadd.s32 1, %s12
    $region7: #{tpu_custom_call.1} parent=1 // loop_footer_branch
      %11 = sbr.rel target = $region3
    $region8: #{tpu_custom_call.1} parent=1 // loop_exit
      _
    %566 = vsyncpa [#allocation3], 1
    %s567 = scalar_lea.sflag [#allocation3], 1
    %568 = vsyncpa %s567, 1

</llo_original>
